<compile_context>
chip_gen: v5e
topology: v5e:2x2
jax: 0.10.0
libtpu: 0.0.40
codegen_flags: <defaults>
</compile_context>

<pallas_src>
import functools

import jax
import jax.numpy as jnp
from jax.experimental import pallas as pl
from jax.experimental.pallas import tpu as pltpu


def _ceil_to(x, m):
    return ((x + m - 1) // m) * m


def gcn_var_kernel(a_ref, x_ref, w_ref, b_ref, drow_ref, dcol_ref,
                   out_ref, acc_ref):
    k = pl.program_id(1)

    @pl.when(k == 0)
    def _():
        acc_ref[...] = jnp.zeros_like(acc_ref)

    # XW_cat for this K-tile of nodes (rows of XW == columns of A_hat),
    # scaled by D^{-1/2} of those nodes.  bf16 MXU, f32 accumulation.
    xw = jnp.dot(x_ref[...], w_ref[...], preferred_element_type=jnp.float32)
    xw = (xw * dcol_ref[...]).astype(jnp.bfloat16)              # [TK, C_pad]
    acc_ref[...] += jnp.dot(a_ref[...], xw,
                            preferred_element_type=jnp.float32)  # [TM, C_pad]

    @pl.when(k == pl.num_programs(1) - 1)
    def _():
        # Row normalization (D^{-1/2} on the left) + bias, applied once.
        out_ref[...] = (acc_ref[...] * drow_ref[...]
                        + b_ref[...]).astype(out_ref.dtype)


@functools.partial(jax.jit, static_argnames=("tm", "tk"))
def variational_linear_encoder(x, edge_index, w_mu, b_mu, w_ls, b_ls,
                               *, tm=256, tk=512):
    N, C_in = x.shape
    C_out = w_mu.shape[1]

    # ---- fuse the two heads into one lane-dense (128-multiple) slab ----
    C2 = 2 * C_out
    C_pad = _ceil_to(C2, 128)
    w_cat = jnp.zeros((C_in, C_pad), jnp.bfloat16)
    w_cat = w_cat.at[:, :C_out].set(w_mu.astype(jnp.bfloat16))
    w_cat = w_cat.at[:, C_out:C2].set(w_ls.astype(jnp.bfloat16))
    b_cat = jnp.zeros((1, C_pad), jnp.float32)
    b_cat = b_cat.at[0, :C_out].set(b_mu.astype(jnp.float32))
    b_cat = b_cat.at[0, C_out:C2].set(b_ls.astype(jnp.float32))

    # ---- tile sizes / padded extents (TM mult of 8, TK mult of 128) ----
    TM = min(tm, _ceil_to(N, 8))        # row tile of A_hat / output
    TK = min(tk, _ceil_to(N, 128))      # contraction (column) tile of A_hat
    Nr = _ceil_to(N, TM)                # padded rows of A / output
    Nc = _ceil_to(N, TK)                # padded cols of A == padded rows of X

    # ---- glue: unnormalized (A + I) in bf16, D^{-1/2} vectors in f32 ----
    src, dst = edge_index[0], edge_index[1]
    idx = jnp.arange(N, dtype=edge_index.dtype)
    a = jnp.zeros((Nr, Nc), jnp.bfloat16).at[dst, src].add(1.0)
    a = a.at[idx, idx].add(1.0)                       # add self loops
    deg = jnp.zeros((N,), jnp.float32).at[dst].add(1.0) + 1.0
    dinv = jnp.where(deg > 0.0, jax.lax.rsqrt(deg), 0.0)
    drow = jnp.zeros((Nr, 1), jnp.float32).at[:N, 0].set(dinv)
    dcol = jnp.zeros((Nc, 1), jnp.float32).at[:N, 0].set(dinv)

    x_p = jnp.zeros((Nc, C_in), jnp.bfloat16).at[:N].set(x.astype(jnp.bfloat16))

    grid = (Nr // TM, Nc // TK)
    out = pl.pallas_call(
        gcn_var_kernel,
        grid=grid,
        in_specs=[
            pl.BlockSpec((TM, TK), lambda i, k: (i, k)),       # A (+I) tile
            pl.BlockSpec((TK, C_in), lambda i, k: (k, 0)),     # X tile
            pl.BlockSpec((C_in, C_pad), lambda i, k: (0, 0)),  # W_cat
            pl.BlockSpec((1, C_pad), lambda i, k: (0, 0)),     # b_cat
            pl.BlockSpec((TM, 1), lambda i, k: (i, 0)),        # D^{-1/2} rows
            pl.BlockSpec((TK, 1), lambda i, k: (k, 0)),        # D^{-1/2} cols
        ],
        out_specs=pl.BlockSpec((TM, C_pad), lambda i, k: (i, 0)),
        out_shape=jax.ShapeDtypeStruct((Nr, C_pad), jnp.float32),
        scratch_shapes=[pltpu.VMEM((TM, C_pad), jnp.float32)],
        compiler_params=pltpu.CompilerParams(
            dimension_semantics=("parallel", "arbitrary"),
            vmem_limit_bytes=64 << 20),
    )(a, x_p, w_cat, b_cat, drow, dcol)

    mu = out[:N, :C_out]
    logstd = out[:N, C_out:C2]
    return mu, logstd


def _reference(x, edge_index, w_mu, b_mu, w_ls, b_ls):
    N = x.shape[0]
    src, dst = edge_index[0], edge_index[1]
    a = jnp.zeros((N, N), jnp.float32).at[dst, src].add(1.0) + jnp.eye(N)
    deg = a.sum(axis=1)
    dinv = jnp.where(deg > 0.0, jax.lax.rsqrt(deg), 0.0)
    a_hat = dinv[:, None] * a * dinv[None, :]
    mu = a_hat @ (x @ w_mu) + b_mu
    ls = a_hat @ (x @ w_ls) + b_ls
    return mu, ls


if __name__ == "__main__":
    key = jax.random.PRNGKey(0)
    N, C_in, C_out, E = 16, 32, 16, 40

    k_x, k_e, k_wm, k_wl = jax.random.split(key, 4)
    x = jax.random.normal(k_x, (N, C_in), dtype=jnp.float32)
    edge_index = jax.random.randint(k_e, (2, E), 0, N, dtype=jnp.int32)

    # deterministic glorot-ish init for the two GCNConv weights; zero biases
    scale = (6.0 / (C_in + C_out)) ** 0.5
    w_mu = jax.random.uniform(k_wm, (C_in, C_out), jnp.float32, -scale, scale)
    w_ls = jax.random.uniform(k_wl, (C_in, C_out), jnp.float32, -scale, scale)
    b_mu = jnp.zeros((C_out,), jnp.float32)
    b_ls = jnp.zeros((C_out,), jnp.float32)

    mu, logstd = variational_linear_encoder(x, edge_index, w_mu, b_mu, w_ls, b_ls)
    jax.block_until_ready((mu, logstd))

    mu_ref, ls_ref = _reference(x, edge_index, w_mu, b_mu, w_ls, b_ls)
    # bf16 inputs / f32 accumulation -> slightly looser tolerance than pure f32
    assert jnp.allclose(mu, mu_ref, atol=2e-2, rtol=2e-2), \
        float(jnp.max(jnp.abs(mu - mu_ref)))
    assert jnp.allclose(logstd, ls_ref, atol=2e-2, rtol=2e-2), \
        float(jnp.max(jnp.abs(logstd - ls_ref)))

    print("KERNEL_OK")
</pallas_src>

<mosaic_0001>
module attributes {stable_mosaic.version = 11 : i64} {
  func.func @gcn_var_kernel(%arg0: i32, %arg1: i32, %arg2: memref<16x128xbf16, #tpu.memory_space<vmem>>, %arg3: memref<128x32xbf16, #tpu.memory_space<vmem>>, %arg4: memref<32x128xbf16, #tpu.memory_space<vmem>>, %arg5: memref<1x128xf32, #tpu.memory_space<vmem>>, %arg6: memref<16x1xf32, #tpu.memory_space<vmem>>, %arg7: memref<128x1xf32, #tpu.memory_space<vmem>>, %arg8: memref<16x128xf32, #tpu.memory_space<vmem>>, %arg9: memref<16x128xf32, #tpu.memory_space<vmem>>) attributes {dimension_semantics = [#tpu.dimension_semantics<parallel>, #tpu.dimension_semantics<arbitrary>], iteration_bounds = array<i64: 1, 1>, scalar_prefetch = 0 : i64, scratch_operands = 1 : i64, tpu.core_type = #tpu.core_type<tc>, window_params = [{transform_indices = @transform_0, window_bounds = array<i64: 16, 128>}, {transform_indices = @transform_1, window_bounds = array<i64: 128, 32>}, {pipeline_mode = #tpu.pipeline_mode<synchronous>, transform_indices = @transform_2, window_bounds = array<i64: 32, 128>}, {pipeline_mode = #tpu.pipeline_mode<synchronous>, transform_indices = @transform_3, window_bounds = array<i64: 1, 128>}, {transform_indices = @transform_4, window_bounds = array<i64: 16, 1>}, {transform_indices = @transform_5, window_bounds = array<i64: 128, 1>}, {transform_indices = @transform_6, window_bounds = array<i64: 16, 128>}]} {
    %c0_i32 = arith.constant 0 : i32
    %0 = arith.cmpi eq, %arg1, %c0_i32 : i32
    %1 = arith.extui %0 : i1 to i32
    %c0_i32_0 = arith.constant 0 : i32
    %2 = arith.cmpi ne, %1, %c0_i32_0 : i32
    scf.if %2 {
      %cst_15 = arith.constant 0.000000e+00 : f32
      %18 = vector.broadcast %cst_15 : f32 to vector<16x128xf32>
      %c0_16 = arith.constant 0 : index
      %c0_17 = arith.constant 0 : index
      %19 = vector.load %arg9[%c0_16, %c0_17] : memref<16x128xf32, #tpu.memory_space<vmem>>, vector<16x128xf32>
      tpu.vector_store %arg9[%c0_16, %c0_17], %18 {strides = array<i32>} : memref<16x128xf32, #tpu.memory_space<vmem>>, vector<16x128xf32>,
    } else {
    }
    %c0 = arith.constant 0 : index
    %c0_1 = arith.constant 0 : index
    %3 = vector.load %arg3[%c0, %c0_1] : memref<128x32xbf16, #tpu.memory_space<vmem>>, vector<128x32xbf16>
    %c0_2 = arith.constant 0 : index
    %c0_3 = arith.constant 0 : index
    %4 = vector.load %arg4[%c0_2, %c0_3] : memref<32x128xbf16, #tpu.memory_space<vmem>>, vector<32x128xbf16>
    %cst = arith.constant dense<0.000000e+00> : vector<128x128xf32>
    %5 = tpu.matmul %3, %4, %cst {dimension_numbers = #tpu.dot_dimension_numbers<[1], [0], [0], [1], [0, 0, 1, 1], [], []>} : vector<128x32xbf16>, vector<32x128xbf16>, vector<128x128xf32> -> vector<128x128xf32>
    %c0_4 = arith.constant 0 : index
    %c0_5 = arith.constant 0 : index
    %6 = vector.load %arg7[%c0_4, %c0_5] : memref<128x1xf32, #tpu.memory_space<vmem>>, vector<128x1xf32>
    %7 = vector.broadcast %6 : vector<128x1xf32> to vector<128x128xf32>
    %8 = arith.mulf %5, %7 : vector<128x128xf32>
    %9 = arith.truncf %8 : vector<128x128xf32> to vector<128x128xbf16>
    %c0_6 = arith.constant 0 : index
    %c0_7 = arith.constant 0 : index
    %10 = vector.load %arg9[%c0_6, %c0_7] : memref<16x128xf32, #tpu.memory_space<vmem>>, vector<16x128xf32>
    %c0_8 = arith.constant 0 : index
    %c0_9 = arith.constant 0 : index
    %11 = vector.load %arg2[%c0_8, %c0_9] : memref<16x128xbf16, #tpu.memory_space<vmem>>, vector<16x128xbf16>
    %cst_10 = arith.constant dense<0.000000e+00> : vector<16x128xf32>
    %12 = tpu.matmul %11, %9, %cst_10 {dimension_numbers = #tpu.dot_dimension_numbers<[1], [0], [0], [1], [0, 0, 1, 1], [], []>} : vector<16x128xbf16>, vector<128x128xbf16>, vector<16x128xf32> -> vector<16x128xf32>
    %13 = arith.addf %10, %12 : vector<16x128xf32>
    %c0_11 = arith.constant 0 : index
    %c0_12 = arith.constant 0 : index
    %14 = vector.load %arg9[%c0_11, %c0_12] : memref<16x128xf32, #tpu.memory_space<vmem>>, vector<16x128xf32>
    tpu.vector_store %arg9[%c0_11, %c0_12], %13 {strides = array<i32>} : memref<16x128xf32, #tpu.memory_space<vmem>>, vector<16x128xf32>,
    %c0_i32_13 = arith.constant 0 : i32
    %15 = arith.cmpi eq, %arg1, %c0_i32_13 : i32
    %16 = arith.extui %15 : i1 to i32
    %c0_i32_14 = arith.constant 0 : i32
    %17 = arith.cmpi ne, %16, %c0_i32_14 : i32
    scf.if %17 {
      %c0_15 = arith.constant 0 : index
      %c0_16 = arith.constant 0 : index
      %18 = vector.load %arg9[%c0_15, %c0_16] : memref<16x128xf32, #tpu.memory_space<vmem>>, vector<16x128xf32>
      %c0_17 = arith.constant 0 : index
      %c0_18 = arith.constant 0 : index
      %19 = vector.load %arg6[%c0_17, %c0_18] : memref<16x1xf32, #tpu.memory_space<vmem>>, vector<16x1xf32>
      %20 = vector.broadcast %19 : vector<16x1xf32> to vector<16x128xf32>
      %21 = arith.mulf %18, %20 : vector<16x128xf32>
      %c0_19 = arith.constant 0 : index
      %c0_20 = arith.constant 0 : index
      %22 = vector.load %arg5[%c0_19, %c0_20] : memref<1x128xf32, #tpu.memory_space<vmem>>, vector<1x128xf32>
      %23 = vector.broadcast %22 : vector<1x128xf32> to vector<16x128xf32>
      %24 = arith.addf %21, %23 : vector<16x128xf32>
      %c0_21 = arith.constant 0 : index
      %c0_22 = arith.constant 0 : index
      %25 = vector.load %arg8[%c0_21, %c0_22] : memref<16x128xf32, #tpu.memory_space<vmem>>, vector<16x128xf32>
      tpu.vector_store %arg8[%c0_21, %c0_22], %24 {strides = array<i32>} : memref<16x128xf32, #tpu.memory_space<vmem>>, vector<16x128xf32>,
    } else {
    }
    return
  }
  func.func @transform_0(%arg0: i32, %arg1: i32) -> (i32, i32) {
    %c0_i32 = arith.constant 0 : i32
    return %arg0, %arg1 : i32, i32
  }
  func.func @transform_1(%arg0: i32, %arg1: i32) -> (i32, i32) {
    %c0_i32 = arith.constant 0 : i32
    %c0_i32_0 = arith.constant 0 : i32
    return %arg1, %c0_i32 : i32, i32
  }
  func.func @transform_2(%arg0: i32, %arg1: i32) -> (i32, i32) {
    %c0_i32 = arith.constant 0 : i32
    %c0_i32_0 = arith.constant 0 : i32
    %c0_i32_1 = arith.constant 0 : i32
    return %c0_i32, %c0_i32_0 : i32, i32
  }
  func.func @transform_3(%arg0: i32, %arg1: i32) -> (i32, i32) {
    %c0_i32 = arith.constant 0 : i32
    %c0_i32_0 = arith.constant 0 : i32
    %c0_i32_1 = arith.constant 0 : i32
    return %c0_i32, %c0_i32_0 : i32, i32
  }
  func.func @transform_4(%arg0: i32, %arg1: i32) -> (i32, i32) {
    %c0_i32 = arith.constant 0 : i32
    %c0_i32_0 = arith.constant 0 : i32
    return %arg0, %c0_i32 : i32, i32
  }
  func.func @transform_5(%arg0: i32, %arg1: i32) -> (i32, i32) {
    %c0_i32 = arith.constant 0 : i32
    %c0_i32_0 = arith.constant 0 : i32
    return %arg1, %c0_i32 : i32, i32
  }
  func.func @transform_6(%arg0: i32, %arg1: i32) -> (i32, i32) {
    %c0_i32 = arith.constant 0 : i32
    %c0_i32_0 = arith.constant 0 : i32
    return %arg0, %c0_i32 : i32, i32
  }
}

</mosaic_0001>

<llo_original>
// kernel: variational_linear_encoder.1
$region0: #{variational_linear_encoder.1}
  #allocation0 [shape = 'u32[]', space=smem, size = 0x4, offset = 0x4, fixed_abs, tag = 'smem constant byte address 0x4 - core index']
  #allocation1 [shape = 'u32[72,128]{1,0:T(1,128)}', space=vmem, size = 0x9000, scoped, tag = 'internal scratch']
  #allocation2 [shape = 'f32[16,128]{1,0:T(8,128)}', space=vmem, size = 0x2000, scoped, tag = 'scratch operand']
  %s0 = inlined_call_operand.vmem [shape: bf16[16,128], index: 0, kind: input, shape index: {}]
  %s1 = inlined_call_operand.vmem [shape: bf16[128,32], index: 1, kind: input, shape index: {}]
  %s2 = inlined_call_operand.vmem [shape: bf16[32,128], index: 2, kind: input, shape index: {}]
  %s3 = inlined_call_operand.vmem [shape: f32[1,128], index: 3, kind: input, shape index: {}]
  %s4 = inlined_call_operand.vmem [shape: f32[16,1], index: 4, kind: input, shape index: {}]
  %s5 = inlined_call_operand.vmem [shape: f32[128,1], index: 5, kind: input, shape index: {}]
  %s6 = inlined_call_operand.vmem [shape: f32[16,128], index: 6, kind: output, shape index: {}]
  %s7 = sld [smem:[#allocation0]]
  $region42: #{variational_linear_encoder.1} parent=0
    _
  %s9 = ssub.s32 1, %s7
  %s10 = scalar_select 0, %s9, %s7
  // Predicated region
  $region2: #{variational_linear_encoder.1} parent=0 // pred_check
    _
  $region3: #{variational_linear_encoder.1} parent=0 // pred_check_branch
    %12 = sbr.rel (0) target = $region5
  $region4: #{variational_linear_encoder.1} parent=0 // pred_region
    _
  $region5: #{variational_linear_encoder.1} parent=0 // pred_fallthru
    _
  // Predicated region
  $region6: #{variational_linear_encoder.1} parent=0 // pred_check
    _
  $region7: #{variational_linear_encoder.1} parent=0 // pred_check_branch
    %14 = sbr.rel (0) target = $region9
  $region8: #{variational_linear_encoder.1} parent=0 // pred_region
    _
  $region9: #{variational_linear_encoder.1} parent=0 // pred_fallthru
    _
  // Predicated region
  $region10: #{variational_linear_encoder.1} parent=0 // pred_check
    _
  $region11: #{variational_linear_encoder.1} parent=0 // pred_check_branch
    %16 = sbr.rel (0) target = $region13
  $region12: #{variational_linear_encoder.1} parent=0 // pred_region
    _
  $region13: #{variational_linear_encoder.1} parent=0 // pred_fallthru
    _
  // Predicated region
  $region14: #{variational_linear_encoder.1} parent=0 // pred_check
    _
  $region15: #{variational_linear_encoder.1} parent=0 // pred_check_branch
    %18 = sbr.rel (0) target = $region17
  $region16: #{variational_linear_encoder.1} parent=0 // pred_region
    _
  $region17: #{variational_linear_encoder.1} parent=0 // pred_fallthru
    _
  // Predicated region
  $region18: #{variational_linear_encoder.1} parent=0 // pred_check
    _
  $region19: #{variational_linear_encoder.1} parent=0 // pred_check_branch
    %20 = sbr.rel (0) target = $region21
  $region20: #{variational_linear_encoder.1} parent=0 // pred_region
    _
  $region21: #{variational_linear_encoder.1} parent=0 // pred_fallthru
    _
  // Predicated region
  $region22: #{variational_linear_encoder.1} parent=0 // pred_check
    _
  $region23: #{variational_linear_encoder.1} parent=0 // pred_check_branch
    %22 = sbr.rel (0) target = $region25
  $region24: #{variational_linear_encoder.1} parent=0 // pred_region
    _
  $region25: #{variational_linear_encoder.1} parent=0 // pred_fallthru
    _
  %p24 = scmp.eq.s32.totalorder 0, 0
  // Predicated region
  $region26: #{variational_linear_encoder.1} parent=0 // pred_check
    %p25 = pneg %p24
  $region27: #{variational_linear_encoder.1} parent=0 // pred_check_branch
    %27 = sbr.rel (%p25) target = $region29
  $region28: #{variational_linear_encoder.1} parent=0 // pred_region
    %28 = vst [vmem:[#allocation2] sm:$0xff] 0.0
    %29 = vst [vmem:[#allocation2 + $0x8] sm:$0xff] 0.0
  $region29: #{variational_linear_encoder.1} parent=0 // pred_fallthru
    _
  %v30 = vld [vmem:[%s1] sm:$0xf]
  %v31 = vld [vmem:[%s1 + $0x4] sm:$0xf]
  %v32 = vld [vmem:[%s1 + $0x8] sm:$0xf]
  %v33 = vld [vmem:[%s1 + $0xc] sm:$0xf]
  %v34 = vld [vmem:[%s1 + $0x10] sm:$0xf]
  %v35 = vld [vmem:[%s1 + $0x14] sm:$0xf]
  %v36 = vld [vmem:[%s1 + $0x18] sm:$0xf]
  %v37 = vld [vmem:[%s1 + $0x1c] sm:$0xf]
  %v38 = vld [vmem:[%s1 + $0x20] sm:$0xf]
  %v39 = vld [vmem:[%s1 + $0x24] sm:$0xf]
  %v40 = vld [vmem:[%s1 + $0x28] sm:$0xf]
  %v41 = vld [vmem:[%s1 + $0x2c] sm:$0xf]
  %v42 = vld [vmem:[%s1 + $0x30] sm:$0xf]
  %v43 = vld [vmem:[%s1 + $0x34] sm:$0xf]
  %v44 = vld [vmem:[%s1 + $0x38] sm:$0xf]
  %v45 = vld [vmem:[%s1 + $0x3c] sm:$0xf]
  %v46 = vld [vmem:[%s2] sm:$0xf]
  %v47 = vld [vmem:[%s2 + $0x4] sm:$0xf]
  %v48 = vld [vmem:[%s2 + $0x8] sm:$0xf]
  %v49 = vld [vmem:[%s2 + $0xc] sm:$0xf]
  %v66 = vunpack.c.l.b16 %v30
  %v67 = vunpack.c.l.b16 %v31
  %v68 = vunpack.c.l.b16 %v32
  %v69 = vunpack.c.l.b16 %v33
  %v70 = vunpack.c.l.b16 %v34
  %v71 = vunpack.c.l.b16 %v35
  %v72 = vunpack.c.l.b16 %v36
  %v73 = vunpack.c.l.b16 %v37
  %v74 = vunpack.c.l.b16 %v38
  %v75 = vunpack.c.l.b16 %v39
  %v76 = vunpack.c.l.b16 %v40
  %v77 = vunpack.c.l.b16 %v41
  %v78 = vunpack.c.l.b16 %v42
  %v79 = vunpack.c.l.b16 %v43
  %v80 = vunpack.c.l.b16 %v44
  %v81 = vunpack.c.l.b16 %v45
  %v82 = vpack.c.b16 %v67, %v66
  %v83 = vpack.c.b16 %v69, %v68
  %v84 = vpack.c.b16 %v71, %v70
  %v85 = vpack.c.b16 %v73, %v72
  %v86 = vpack.c.b16 %v75, %v74
  %v87 = vpack.c.b16 %v77, %v76
  %v88 = vpack.c.b16 %v79, %v78
  %v89 = vpack.c.b16 %v81, %v80
  %v94 = vunpack.c.l.b16 %v46
  %v95 = vunpack.c.l.b16 %v47
  %v96 = vunpack.c.l.b16 %v48
  %v97 = vunpack.c.l.b16 %v49
  %v98 = vpack.c.b16 %v95, %v94
  %v99 = vpack.c.b16 %v97, %v96
  %vm102 = vcmask 261120
  %v104 = vsel %vm102, %v82, 0
  %v107 = vsel %vm102, %v83, 0
  %v110 = vsel %vm102, %v84, 0
  %v113 = vsel %vm102, %v85, 0
  %v116 = vsel %vm102, %v86, 0
  %v119 = vsel %vm102, %v87, 0
  %v122 = vsel %vm102, %v88, 0
  %v125 = vsel %vm102, %v89, 0
  %127 = vmatpush.bf16.msra.mxu0 0
  %128 = vmatpush.bf16.msra.mxu0 0
  %129 = vmatpush.bf16.msra.mxu0 0
  %130 = vmatpush.bf16.msra.mxu0 0
  %131 = vmatpush.bf16.msra.mxu0 0
  %132 = vmatpush.bf16.msra.mxu0 0
  %133 = vmatpush.bf16.msra.mxu0 %v99
  %134 = vmatpush.bf16.msra.mxu0 %v98
  %135 = vmatmul.bf16.gmra.mxu0 %v104
  %v136 = vpop.f32.mrf.mxu0
  %v137 = vadd.f32 0.0, %v136
  %v138 = vpop.f32.mrf.mxu0
  %v139 = vadd.f32 0.0, %v138
  %140 = vmatmul.bf16.gmra.mxu0 %v107
  %v141 = vpop.f32.mrf.mxu0
  %v142 = vadd.f32 0.0, %v141
  %v143 = vpop.f32.mrf.mxu0
  %v144 = vadd.f32 0.0, %v143
  %145 = vmatmul.bf16.gmra.mxu0 %v110
  %v146 = vpop.f32.mrf.mxu0
  %v147 = vadd.f32 0.0, %v146
  %v148 = vpop.f32.mrf.mxu0
  %v149 = vadd.f32 0.0, %v148
  %150 = vmatmul.bf16.gmra.mxu0 %v113
  %v151 = vpop.f32.mrf.mxu0
  %v152 = vadd.f32 0.0, %v151
  %v153 = vpop.f32.mrf.mxu0
  %v154 = vadd.f32 0.0, %v153
  %155 = vmatmul.bf16.gmra.mxu0 %v116
  %v156 = vpop.f32.mrf.mxu0
  %v157 = vadd.f32 0.0, %v156
  %v158 = vpop.f32.mrf.mxu0
  %v159 = vadd.f32 0.0, %v158
  %160 = vmatmul.bf16.gmra.mxu0 %v119
  %v161 = vpop.f32.mrf.mxu0
  %v162 = vadd.f32 0.0, %v161
  %v163 = vpop.f32.mrf.mxu0
  %v164 = vadd.f32 0.0, %v163
  %165 = vmatmul.bf16.gmra.mxu0 %v122
  %v166 = vpop.f32.mrf.mxu0
  %v167 = vadd.f32 0.0, %v166
  %v168 = vpop.f32.mrf.mxu0
  %v169 = vadd.f32 0.0, %v168
  %170 = vmatmul.bf16.gmra.mxu0 %v125
  %v171 = vpop.f32.mrf.mxu0
  %v172 = vadd.f32 0.0, %v171
  %v173 = vpop.f32.mrf.mxu0
  %v174 = vadd.f32 0.0, %v173
  %175 = vdwg.mxu0
  %v176 = vld [vmem:[%s5] sm:$0xff]
  %v177 = vld [vmem:[%s5 + $0x8] sm:$0xff]
  %v178 = vld [vmem:[%s5 + $0x10] sm:$0xff]
  %v179 = vld [vmem:[%s5 + $0x18] sm:$0xff]
  %v180 = vld [vmem:[%s5 + $0x20] sm:$0xff]
  %v181 = vld [vmem:[%s5 + $0x28] sm:$0xff]
  %v182 = vld [vmem:[%s5 + $0x30] sm:$0xff]
  %v183 = vld [vmem:[%s5 + $0x38] sm:$0xff]
  %v184 = vld [vmem:[%s5 + $0x40] sm:$0xff]
  %v185 = vld [vmem:[%s5 + $0x48] sm:$0xff]
  %v186 = vld [vmem:[%s5 + $0x50] sm:$0xff]
  %v187 = vld [vmem:[%s5 + $0x58] sm:$0xff]
  %v188 = vld [vmem:[%s5 + $0x60] sm:$0xff]
  %v189 = vld [vmem:[%s5 + $0x68] sm:$0xff]
  %v190 = vld [vmem:[%s5 + $0x70] sm:$0xff]
  %v191 = vld [vmem:[%s5 + $0x78] sm:$0xff]
  %193 = vset.pattern.permute.xlu0 0
  %194 = vperm.xlu0 %193, %v176
  %v195 = vpop.permute.xlu0 %194
  %198 = vset.pattern.permute.xlu0 0
  %199 = vperm.xlu0 %198, %v177
  %v200 = vpop.permute.xlu0 %199
  %203 = vset.pattern.permute.xlu0 0
  %204 = vperm.xlu0 %203, %v178
  %v205 = vpop.permute.xlu0 %204
  %208 = vset.pattern.permute.xlu0 0
  %209 = vperm.xlu0 %208, %v179
  %v210 = vpop.permute.xlu0 %209
  %213 = vset.pattern.permute.xlu0 0
  %214 = vperm.xlu0 %213, %v180
  %v215 = vpop.permute.xlu0 %214
  %218 = vset.pattern.permute.xlu0 0
  %219 = vperm.xlu0 %218, %v181
  %v220 = vpop.permute.xlu0 %219
  %223 = vset.pattern.permute.xlu0 0
  %224 = vperm.xlu0 %223, %v182
  %v225 = vpop.permute.xlu0 %224
  %228 = vset.pattern.permute.xlu0 0
  %229 = vperm.xlu0 %228, %v183
  %v230 = vpop.permute.xlu0 %229
  %233 = vset.pattern.permute.xlu0 0
  %234 = vperm.xlu0 %233, %v184
  %v235 = vpop.permute.xlu0 %234
  %238 = vset.pattern.permute.xlu0 0
  %239 = vperm.xlu0 %238, %v185
  %v240 = vpop.permute.xlu0 %239
  %243 = vset.pattern.permute.xlu0 0
  %244 = vperm.xlu0 %243, %v186
  %v245 = vpop.permute.xlu0 %244
  %248 = vset.pattern.permute.xlu0 0
  %249 = vperm.xlu0 %248, %v187
  %v250 = vpop.permute.xlu0 %249
  %253 = vset.pattern.permute.xlu0 0
  %254 = vperm.xlu0 %253, %v188
  %v255 = vpop.permute.xlu0 %254
  %258 = vset.pattern.permute.xlu0 0
  %259 = vperm.xlu0 %258, %v189
  %v260 = vpop.permute.xlu0 %259
  %263 = vset.pattern.permute.xlu0 0
  %264 = vperm.xlu0 %263, %v190
  %v265 = vpop.permute.xlu0 %264
  %268 = vset.pattern.permute.xlu0 0
  %269 = vperm.xlu0 %268, %v191
  %v270 = vpop.permute.xlu0 %269
  %v272 = vmul.f32 %v137, %v195
  %v273 = vmul.f32 %v139, %v200
  %v274 = vmul.f32 %v142, %v205
  %v275 = vmul.f32 %v144, %v210
  %v276 = vmul.f32 %v147, %v215
  %v277 = vmul.f32 %v149, %v220
  %v278 = vmul.f32 %v152, %v225
  %v279 = vmul.f32 %v154, %v230
  %v280 = vmul.f32 %v157, %v235
  %v281 = vmul.f32 %v159, %v240
  %v282 = vmul.f32 %v162, %v245
  %v283 = vmul.f32 %v164, %v250
  %v284 = vmul.f32 %v167, %v255
  %v285 = vmul.f32 %v169, %v260
  %v286 = vmul.f32 %v172, %v265
  %v287 = vmul.f32 %v174, %v270
  %v288 = vpack.c.bf16 %v273, %v272
  %v289 = vpack.c.bf16 %v275, %v274
  %v290 = vpack.c.bf16 %v277, %v276
  %v291 = vpack.c.bf16 %v279, %v278
  %v292 = vpack.c.bf16 %v281, %v280
  %v293 = vpack.c.bf16 %v283, %v282
  %v294 = vpack.c.bf16 %v285, %v284
  %v295 = vpack.c.bf16 %v287, %v286
  %v296 = vld [vmem:[#allocation2] sm:$0xff]
  %v297 = vld [vmem:[#allocation2 + $0x8] sm:$0xff]
  %v298 = vld [vmem:[%s0] sm:$0xf]
  %v299 = vld [vmem:[%s0 + $0x4] sm:$0xf]
  %v302 = vunpack.c.l.b16 %v298
  %v303 = vunpack.c.l.b16 %v299
  %v304 = vpack.c.b16 %v303, %v302
  %306 = vmatpush.bf16.msra.mxu0 %v295
  %307 = vmatpush.bf16.msra.mxu0 %v294
  %308 = vmatpush.bf16.msra.mxu0 %v293
  %309 = vmatpush.bf16.msra.mxu0 %v292
  %310 = vmatpush.bf16.msra.mxu0 %v291
  %311 = vmatpush.bf16.msra.mxu0 %v290
  %312 = vmatpush.bf16.msra.mxu0 %v289
  %313 = vmatpush.bf16.msra.mxu0 %v288
  %314 = vmatmul.bf16.gmra.mxu0 %v304
  %v315 = vpop.f32.mrf.mxu0
  %v316 = vadd.f32 0.0, %v315
  %v317 = vpop.f32.mrf.mxu0
  %v318 = vadd.f32 0.0, %v317
  %319 = vdwg.mxu0
  %v320 = vadd.f32 %v296, %v316
  %v321 = vadd.f32 %v297, %v318
  %322 = vst [vmem:[#allocation2] sm:$0xff] %v320
  %323 = vst [vmem:[#allocation2 + $0x8] sm:$0xff] %v321
  // Predicated region
  $region30: #{variational_linear_encoder.1} parent=0 // pred_check
    %p324 = pneg %p24
  $region31: #{variational_linear_encoder.1} parent=0 // pred_check_branch
    %326 = sbr.rel (%p324) target = $region33
  $region32: #{variational_linear_encoder.1} parent=0 // pred_region
    %v327 = vld [vmem:[#allocation2] sm:$0xff]
    %v328 = vld [vmem:[#allocation2 + $0x8] sm:$0xff]
    %v329 = vld [vmem:[%s4] sm:$0xff]
    %v330 = vld [vmem:[%s4 + $0x8] sm:$0xff]
    %332 = vset.pattern.permute.xlu0 0
    %333 = vperm.xlu0 %332, %v329
    %v334 = vpop.permute.xlu0 %333
    %337 = vset.pattern.permute.xlu0 0
    %338 = vperm.xlu0 %337, %v330
    %v339 = vpop.permute.xlu0 %338
    %v341 = vmul.f32 %v327, %v334
    %v342 = vmul.f32 %v328, %v339
    %v343 = vld [vmem:[%s3] sm:$0x1]
    %v345 = vperm.slane %v343, 0
    %v347 = vadd.f32 %v341, %v345
    %v348 = vadd.f32 %v342, %v345
    %349 = vst [vmem:[%s6] sm:$0xff] %v347
    %350 = vst [vmem:[%s6 + $0x8] sm:$0xff] %v348
  $region33: #{variational_linear_encoder.1} parent=0 // pred_fallthru
    _
  // Predicated region
  $region34: #{variational_linear_encoder.1} parent=0 // pred_check
    _
  $region35: #{variational_linear_encoder.1} parent=0 // pred_check_branch
    %352 = sbr.rel (0) target = $region37
  $region36: #{variational_linear_encoder.1} parent=0 // pred_region
    _
  $region37: #{variational_linear_encoder.1} parent=0 // pred_fallthru
    _
  // Predicated region
  $region38: #{variational_linear_encoder.1} parent=0 // pred_check
    _
  $region39: #{variational_linear_encoder.1} parent=0 // pred_check_branch
    %354 = sbr.rel (0) target = $region41
  $region40: #{variational_linear_encoder.1} parent=0 // pred_region
    _
  $region41: #{variational_linear_encoder.1} parent=0 // pred_fallthru
    _

</llo_original>
